<compile_context>
chip_gen: v6e
topology: v6e:2x2x1
jax: 0.10.0
libtpu: 0.0.40
codegen_flags: <defaults>
</compile_context>

<pallas_src>
import functools

import jax
import jax.numpy as jnp
from jax.experimental import pallas as pl
from jax.experimental.pallas import tpu as pltpu


def _round_up(v, m):
    return ((v + m - 1) // m) * m


def _cdiv(a, b):
    return (a + b - 1) // b


def _mlp_kernel(x_ref, w1_ref, b1_ref, w2_ref, b2_ref, o_ref, acc_ref):
    # x_ref:  (TB, K_pad)        pipelined over batch tiles
    # w1_ref: (K_pad, TH)        hidden-tile slice of W1 (resident if TH == H_pad)
    # b1_ref: (1, TH)    f32
    # w2_ref: (TH, N_pad)        hidden-tile slice of W2
    # b2_ref: (1, N_pad) f32     resident
    # o_ref:  (TB, N_pad)        pipelined over batch tiles
    # acc_ref:(TB, N_pad) f32    VMEM scratch accumulator over hidden tiles
    hid = pl.program_id(1)

    @pl.when(hid == 0)
    def _():
        acc_ref[...] = jnp.zeros_like(acc_ref)

    # fc1 slice on the MXU in native dtype, f32 accumulation.
    h = jnp.dot(x_ref[...], w1_ref[...], preferred_element_type=jnp.float32)
    # Bias-add + ReLU in f32 on the VPU; (1, TH) broadcasts over the batch tile.
    # (Padded hidden columns are exactly zero: relu(0 + 0) = 0 -> no contribution.)
    h = jnp.maximum(h + b1_ref[...], 0.0)

    # fc2 slice: feed the MXU in the weight dtype (no-op for f32, halves vreg
    # pressure for bf16), accumulate in the f32 scratch.
    acc_ref[...] += jnp.dot(h.astype(w2_ref.dtype), w2_ref[...],
                            preferred_element_type=jnp.float32)

    @pl.when(hid == pl.num_programs(1) - 1)
    def _():
        o_ref[...] = (acc_ref[...] + b2_ref[...]).astype(o_ref.dtype)


def _vmem_capacity_bytes():
    """Per-TensorCore VMEM capacity; conservative fallback if unavailable."""
    try:
        cap = getattr(pltpu.get_tpu_info(), "vmem_capacity_bytes", None)
        if cap:
            return int(cap)
    except Exception:
        pass
    return 64 * 2**20  # v7x per-TC (smallest of v5e/v6e/v7x)


@functools.partial(jax.jit, static_argnames=("num_inputs", "block_batch"))
def mlp_forward(x, w1, b1, w2, b2, *, num_inputs, block_batch=512):
    """x: any shape flattening to num_inputs per row (== torch x.view(-1, K)).

    w1: (num_inputs, num_hiddens)   (PyTorch fc1.weight transposed)
    b1: (num_hiddens,)
    w2: (num_hiddens, num_outputs)  (PyTorch fc2.weight transposed)
    b2: (num_outputs,)
    """
    x2d = x.reshape(-1, num_inputs)
    batch = x2d.shape[0]
    num_hiddens = w1.shape[1]
    num_outputs = w2.shape[1]
    dtype = x2d.dtype
    isz = jnp.dtype(dtype).itemsize
    sublane = max(8, 32 // isz)          # 8 f32 / 16 bf16 / 32 int8-fp8

    # ---- lane padding: K, hidden and output dims to 128-lane multiples -----
    k_pad = _round_up(num_inputs, 128)
    h_pad = _round_up(num_hiddens, 128)
    n_pad = _round_up(num_outputs, 128)

    # ---- generation-aware tile plan ----------------------------------------
    vmem_cap = _vmem_capacity_bytes()
    budget = int(0.45 * vmem_cap)        # leave room for compiler scratch/pipelining

    bb = _round_up(max(int(block_batch), sublane), sublane)
    ntiles = _cdiv(batch, bb)
    if ntiles == 1 and batch >= 256:
        ntiles = 2                       # >=2 batch tiles so v7x megacore splits work
    tb = _round_up(_cdiv(batch, ntiles), sublane)

    def vmem_est(tb_, th_, resident_):
        wbuf = 1 if resident_ else 2                         # weight buffer count
        return (wbuf * (k_pad * th_ + th_ * n_pad) * isz     # W1 / W2 tiles
                + (th_ + n_pad) * 4                          # biases (f32)
                + 2 * tb_ * (k_pad + n_pad) * isz            # double-buffered x / out
                + tb_ * n_pad * 4                            # f32 accumulator scratch
                + tb_ * th_ * 4)                             # f32 fc1 intermediate

    th = h_pad                           # start with weights fully resident
    while vmem_est(tb, th, th == h_pad) > budget and tb > sublane:
        tb = _round_up(max(tb // 2, sublane), sublane)       # shrink batch tile first
    while vmem_est(tb, th, th == h_pad) > budget and th > 128:
        th = _round_up(max(th // 2, 128), 128)               # then tile the hidden dim

    h_pad = _round_up(h_pad, th)         # hidden padded to a multiple of its tile
    batch_p = _round_up(batch, tb)
    n_hid_tiles = h_pad // th
    resident = n_hid_tiles == 1

    # ---- zero-padding (math-preserving: padded rows/cols contribute 0) -----
    if k_pad != num_inputs:
        x2d = jnp.pad(x2d, ((0, 0), (0, k_pad - num_inputs)))
        w1 = jnp.pad(w1, ((0, k_pad - num_inputs), (0, 0)))
    if batch_p != batch:
        x2d = jnp.pad(x2d, ((0, batch_p - batch), (0, 0)))
    if h_pad != num_hiddens:
        w1 = jnp.pad(w1, ((0, 0), (0, h_pad - num_hiddens)))
        b1 = jnp.pad(b1, (0, h_pad - num_hiddens))
        w2 = jnp.pad(w2, ((0, h_pad - num_hiddens), (0, 0)))
    if n_pad != num_outputs:
        w2 = jnp.pad(w2, ((0, 0), (0, n_pad - num_outputs)))
        b2 = jnp.pad(b2, (0, n_pad - num_outputs))

    # Matmuls run in the input dtype (bf16 callers get the fast MXU path);
    # biases stay f32 so bias-add / ReLU / accumulation are exact in f32.
    w1 = w1.astype(dtype)
    w2 = w2.astype(dtype)
    b1_2d = b1.reshape(1, h_pad).astype(jnp.float32)
    b2_2d = b2.reshape(1, n_pad).astype(jnp.float32)

    # ---- BlockSpecs ---------------------------------------------------------
    def _wspec(shape, imap):
        # Grid-constant (resident) operands: single buffer instead of the
        # default double buffer -> halves resident-weight VMEM footprint.
        if resident:
            return pl.BlockSpec(shape, imap, pipeline_mode=pl.Buffered(1))
        return pl.BlockSpec(shape, imap)

    grid = (batch_p // tb, n_hid_tiles)

    in_specs = [
        pl.BlockSpec((tb, k_pad), lambda i, j: (i, 0)),     # x: pipelined over batch
        _wspec((k_pad, th), lambda i, j: (0, j)),           # W1 hidden slice
        _wspec((1, th), lambda i, j: (0, j)),               # b1 hidden slice
        _wspec((th, n_pad), lambda i, j: (j, 0)),           # W2 hidden slice
        _wspec((1, n_pad), lambda i, j: (0, 0)),            # b2 (always constant)
    ]
    out_spec = pl.BlockSpec((tb, n_pad), lambda i, j: (i, 0))

    # ---- cost hint + explicit VMEM limit ------------------------------------
    flops = 2 * batch_p * (k_pad * h_pad + h_pad * n_pad)
    bytes_accessed = (batch_p * (k_pad + n_pad) * isz
                      + (k_pad * h_pad + h_pad * n_pad) * isz
                      + (h_pad + n_pad) * 4)
    cost = pl.CostEstimate(flops=flops, transcendentals=0,
                           bytes_accessed=bytes_accessed)

    est = vmem_est(tb, th, resident)
    vmem_limit = int(min(int(0.92 * vmem_cap), max(2 * est, 4 * 2**20)))
    vmem_limit = max(vmem_limit, min(int(0.92 * vmem_cap), int(1.25 * est)))

    out = pl.pallas_call(
        _mlp_kernel,
        out_shape=jax.ShapeDtypeStruct((batch_p, n_pad), dtype),
        grid=grid,
        in_specs=in_specs,
        out_specs=out_spec,
        scratch_shapes=[pltpu.VMEM((tb, n_pad), jnp.float32)],
        compiler_params=pltpu.CompilerParams(
            dimension_semantics=("parallel", "arbitrary"),
            vmem_limit_bytes=vmem_limit,
        ),
        cost_estimate=cost,
    )(x2d, w1, b1_2d, w2, b2_2d)

    # Slice off batch padding and the lane padding of the output dim.
    return out[:batch, :num_outputs]


def init_mlp_params(key, num_inputs, num_hiddens, num_outputs, dtype=jnp.float32):
    """Deterministic init matching nn.Linear's U(-1/sqrt(fan_in), 1/sqrt(fan_in))."""
    k1, k2, k3, k4 = jax.random.split(key, 4)
    bound1 = 1.0 / jnp.sqrt(num_inputs)
    bound2 = 1.0 / jnp.sqrt(num_hiddens)
    # Stored as (in_features, out_features) == PyTorch weight transposed.
    w1 = jax.random.uniform(k1, (num_inputs, num_hiddens), dtype, -bound1, bound1)
    b1 = jax.random.uniform(k2, (num_hiddens,), dtype, -bound1, bound1)
    w2 = jax.random.uniform(k3, (num_hiddens, num_outputs), dtype, -bound2, bound2)
    b2 = jax.random.uniform(k4, (num_outputs,), dtype, -bound2, bound2)
    return w1, b1, w2, b2


if __name__ == "__main__":
    # Small shapes: x (2, 4, 16, 16) -> view(-1, 1024) -> (2, 1024)
    num_inputs, num_hiddens, num_outputs = 1024, 256, 32

    key = jax.random.PRNGKey(0)
    kx, kp = jax.random.split(key)

    x = jax.random.normal(kx, (2, 4, 16, 16), dtype=jnp.float32)
    w1, b1, w2, b2 = init_mlp_params(kp, num_inputs, num_hiddens, num_outputs)

    out = mlp_forward(x, w1, b1, w2, b2, num_inputs=num_inputs)
    out = jax.block_until_ready(out)

    # Reference check in plain JAX (same math as the PyTorch module).
    x2d = x.reshape(-1, num_inputs)
    ref = jnp.maximum(x2d @ w1 + b1, 0.0) @ w2 + b2
    assert out.shape == (2, num_outputs), out.shape
    assert jnp.allclose(out, ref, atol=1e-4, rtol=1e-4), float(jnp.max(jnp.abs(out - ref)))

    print("KERNEL_OK")
</pallas_src>

<mosaic_0001>
module attributes {stable_mosaic.version = 11 : i64} {
  func.func @_mlp_kernel(%arg0: i32, %arg1: i32, %arg2: memref<8x1024xf32, #tpu.memory_space<vmem>>, %arg3: memref<1024x256xf32, #tpu.memory_space<vmem>>, %arg4: memref<1x256xf32, #tpu.memory_space<vmem>>, %arg5: memref<256x128xf32, #tpu.memory_space<vmem>>, %arg6: memref<1x128xf32, #tpu.memory_space<vmem>>, %arg7: memref<8x128xf32, #tpu.memory_space<vmem>>, %arg8: memref<8x128xf32, #tpu.memory_space<vmem>>) attributes {dimension_semantics = [#tpu.dimension_semantics<parallel>, #tpu.dimension_semantics<arbitrary>], iteration_bounds = array<i64: 1, 1>, scalar_prefetch = 0 : i64, scratch_operands = 1 : i64, tpu.core_type = #tpu.core_type<tc>, window_params = [{transform_indices = @transform_0, window_bounds = array<i64: 8, 1024>}, {pipeline_mode = #tpu.pipeline_mode<synchronous>, transform_indices = @transform_1, window_bounds = array<i64: 1024, 256>}, {pipeline_mode = #tpu.pipeline_mode<synchronous>, transform_indices = @transform_2, window_bounds = array<i64: 1, 256>}, {pipeline_mode = #tpu.pipeline_mode<synchronous>, transform_indices = @transform_3, window_bounds = array<i64: 256, 128>}, {pipeline_mode = #tpu.pipeline_mode<synchronous>, transform_indices = @transform_4, window_bounds = array<i64: 1, 128>}, {transform_indices = @transform_5, window_bounds = array<i64: 8, 128>}]} {
    %c0_i32 = arith.constant 0 : i32
    %0 = arith.cmpi eq, %arg1, %c0_i32 : i32
    %1 = arith.extui %0 : i1 to i32
    %c0_i32_0 = arith.constant 0 : i32
    %2 = arith.cmpi ne, %1, %c0_i32_0 : i32
    scf.if %2 {
      %cst_16 = arith.constant 0.000000e+00 : f32
      %19 = vector.broadcast %cst_16 : f32 to vector<8x128xf32>
      %c0_17 = arith.constant 0 : index
      %c0_18 = arith.constant 0 : index
      %20 = vector.load %arg8[%c0_17, %c0_18] : memref<8x128xf32, #tpu.memory_space<vmem>>, vector<8x128xf32>
      tpu.vector_store %arg8[%c0_17, %c0_18], %19 {strides = array<i32>} : memref<8x128xf32, #tpu.memory_space<vmem>>, vector<8x128xf32>,
    } else {
    }
    %c0 = arith.constant 0 : index
    %c0_1 = arith.constant 0 : index
    %3 = vector.load %arg2[%c0, %c0_1] : memref<8x1024xf32, #tpu.memory_space<vmem>>, vector<8x1024xf32>
    %c0_2 = arith.constant 0 : index
    %c0_3 = arith.constant 0 : index
    %4 = vector.load %arg3[%c0_2, %c0_3] : memref<1024x256xf32, #tpu.memory_space<vmem>>, vector<1024x256xf32>
    %cst = arith.constant dense<0.000000e+00> : vector<8x256xf32>
    %5 = tpu.matmul %3, %4, %cst {dimension_numbers = #tpu.dot_dimension_numbers<[1], [0], [0], [1], [0, 0, 1, 1], [], []>} : vector<8x1024xf32>, vector<1024x256xf32>, vector<8x256xf32> -> vector<8x256xf32>
    %c0_4 = arith.constant 0 : index
    %c0_5 = arith.constant 0 : index
    %6 = vector.load %arg4[%c0_4, %c0_5] : memref<1x256xf32, #tpu.memory_space<vmem>>, vector<1x256xf32>
    %7 = vector.broadcast %6 : vector<1x256xf32> to vector<8x256xf32>
    %8 = arith.addf %5, %7 : vector<8x256xf32>
    %cst_6 = arith.constant 0.000000e+00 : f32
    %9 = vector.broadcast %cst_6 : f32 to vector<8x256xf32>
    %10 = arith.maximumf %8, %9 : vector<8x256xf32>
    %c0_7 = arith.constant 0 : index
    %c0_8 = arith.constant 0 : index
    %11 = vector.load %arg8[%c0_7, %c0_8] : memref<8x128xf32, #tpu.memory_space<vmem>>, vector<8x128xf32>
    %c0_9 = arith.constant 0 : index
    %c0_10 = arith.constant 0 : index
    %12 = vector.load %arg5[%c0_9, %c0_10] : memref<256x128xf32, #tpu.memory_space<vmem>>, vector<256x128xf32>
    %cst_11 = arith.constant dense<0.000000e+00> : vector<8x128xf32>
    %13 = tpu.matmul %10, %12, %cst_11 {dimension_numbers = #tpu.dot_dimension_numbers<[1], [0], [0], [1], [0, 0, 1, 1], [], []>} : vector<8x256xf32>, vector<256x128xf32>, vector<8x128xf32> -> vector<8x128xf32>
    %14 = arith.addf %11, %13 : vector<8x128xf32>
    %c0_12 = arith.constant 0 : index
    %c0_13 = arith.constant 0 : index
    %15 = vector.load %arg8[%c0_12, %c0_13] : memref<8x128xf32, #tpu.memory_space<vmem>>, vector<8x128xf32>
    tpu.vector_store %arg8[%c0_12, %c0_13], %14 {strides = array<i32>} : memref<8x128xf32, #tpu.memory_space<vmem>>, vector<8x128xf32>,
    %c0_i32_14 = arith.constant 0 : i32
    %16 = arith.cmpi eq, %arg1, %c0_i32_14 : i32
    %17 = arith.extui %16 : i1 to i32
    %c0_i32_15 = arith.constant 0 : i32
    %18 = arith.cmpi ne, %17, %c0_i32_15 : i32
    scf.if %18 {
      %c0_16 = arith.constant 0 : index
      %c0_17 = arith.constant 0 : index
      %19 = vector.load %arg8[%c0_16, %c0_17] : memref<8x128xf32, #tpu.memory_space<vmem>>, vector<8x128xf32>
      %c0_18 = arith.constant 0 : index
      %c0_19 = arith.constant 0 : index
      %20 = vector.load %arg6[%c0_18, %c0_19] : memref<1x128xf32, #tpu.memory_space<vmem>>, vector<1x128xf32>
      %21 = vector.broadcast %20 : vector<1x128xf32> to vector<8x128xf32>
      %22 = arith.addf %19, %21 : vector<8x128xf32>
      %c0_20 = arith.constant 0 : index
      %c0_21 = arith.constant 0 : index
      %23 = vector.load %arg7[%c0_20, %c0_21] : memref<8x128xf32, #tpu.memory_space<vmem>>, vector<8x128xf32>
      tpu.vector_store %arg7[%c0_20, %c0_21], %22 {strides = array<i32>} : memref<8x128xf32, #tpu.memory_space<vmem>>, vector<8x128xf32>,
    } else {
    }
    return
  }
  func.func @transform_0(%arg0: i32, %arg1: i32) -> (i32, i32) {
    %c0_i32 = arith.constant 0 : i32
    %c0_i32_0 = arith.constant 0 : i32
    return %arg0, %c0_i32 : i32, i32
  }
  func.func @transform_1(%arg0: i32, %arg1: i32) -> (i32, i32) {
    %c0_i32 = arith.constant 0 : i32
    %c0_i32_0 = arith.constant 0 : i32
    return %c0_i32, %arg1 : i32, i32
  }
  func.func @transform_2(%arg0: i32, %arg1: i32) -> (i32, i32) {
    %c0_i32 = arith.constant 0 : i32
    %c0_i32_0 = arith.constant 0 : i32
    return %c0_i32, %arg1 : i32, i32
  }
  func.func @transform_3(%arg0: i32, %arg1: i32) -> (i32, i32) {
    %c0_i32 = arith.constant 0 : i32
    %c0_i32_0 = arith.constant 0 : i32
    return %arg1, %c0_i32 : i32, i32
  }
  func.func @transform_4(%arg0: i32, %arg1: i32) -> (i32, i32) {
    %c0_i32 = arith.constant 0 : i32
    %c0_i32_0 = arith.constant 0 : i32
    %c0_i32_1 = arith.constant 0 : i32
    return %c0_i32, %c0_i32_0 : i32, i32
  }
  func.func @transform_5(%arg0: i32, %arg1: i32) -> (i32, i32) {
    %c0_i32 = arith.constant 0 : i32
    %c0_i32_0 = arith.constant 0 : i32
    return %arg0, %c0_i32 : i32, i32
  }
}

</mosaic_0001>

<llo_original>
// kernel: mlp_forward.1
$region0: #{mlp_forward.1}
  #allocation0 [shape = 'u32[]', space=smem, size = 0x4, offset = 0x4, fixed_abs, tag = 'smem constant byte address 0x4 - core index']
  #allocation1 [shape = 'u32[144,128]{1,0:T(1,128)}', space=vmem, size = 0x12000, scoped, tag = 'internal scratch']
  #allocation2 [shape = 'f32[8,128]{1,0:T(8,128)}', space=vmem, size = 0x1000, scoped, tag = 'scratch operand']
  %s0 = inlined_call_operand.vmem [shape: f32[8,1024], index: 0, kind: input, shape index: {}]
  %s1 = inlined_call_operand.hbm [shape: f32[1024,256], index: 1, kind: input, shape index: {}]
  %s2 = inlined_call_operand.vmem [shape: f32[1,256], index: 2, kind: input, shape index: {}]
  %s3 = inlined_call_operand.vmem [shape: f32[256,128], index: 3, kind: input, shape index: {}]
  %s4 = inlined_call_operand.vmem [shape: f32[1,128], index: 4, kind: input, shape index: {}]
  %s5 = inlined_call_operand.vmem [shape: f32[8,128], index: 5, kind: output, shape index: {}]
  %s6 = sld [smem:[#allocation0]]
  $region42: #{mlp_forward.1} parent=0
    _
  %s8 = ssub.s32 1, %s6
  %s9 = scalar_select 0, %s8, %s6
  $region1: #{mlp_forward.1} parent=0
    #allocation3 [shape = 'u8[1048576]{0}', space=vmem, size = 0x100000, scoped, tag = 'input window, operand 1, single buffered']
    #allocation4 [shape = 's32[1]{0}', space=sflag, size = 0x4, scoped, tag = 'scoped memory for mlp_forward.1']
    %10 = vsyncpa [#allocation4], 0
    // Predicated region
    $region2: #{mlp_forward.1} parent=1 // pred_check
      _
    $region3: #{mlp_forward.1} parent=1 // pred_check_branch
      %12 = sbr.rel (0) target = $region5
    $region4: #{mlp_forward.1} parent=1 // pred_region
      _
    $region5: #{mlp_forward.1} parent=1 // pred_fallthru
      _
    // Predicated region
    $region6: #{mlp_forward.1} parent=1 // pred_check
      _
    $region7: #{mlp_forward.1} parent=1 // pred_check_branch
      %14 = sbr.rel (0) target = $region9
    $region8: #{mlp_forward.1} parent=1 // pred_region
      %s16 = ssub.s32 32768, 32768
      %17 = vsyncadd [#allocation4], %s16
      %s18 = sshll.u32 [#allocation3], 4
      %s19 = int_to_ptr.vmem [resolvable:$true] %s18
      %24 = dma.hbm_to_vmem [thread:$0]  %s1, 32768, %s19, [#allocation4], 256, 256, 16
    $region9: #{mlp_forward.1} parent=1 // pred_fallthru
      _
    // Predicated region
    $region10: #{mlp_forward.1} parent=1 // pred_check
      _
    $region11: #{mlp_forward.1} parent=1 // pred_check_branch
      %26 = sbr.rel (0) target = $region13
    $region12: #{mlp_forward.1} parent=1 // pred_region
      _
    $region13: #{mlp_forward.1} parent=1 // pred_fallthru
      _
    // Predicated region
    $region14: #{mlp_forward.1} parent=1 // pred_check
      _
    $region15: #{mlp_forward.1} parent=1 // pred_check_branch
      %28 = sbr.rel (0) target = $region17
    $region16: #{mlp_forward.1} parent=1 // pred_region
      _
    $region17: #{mlp_forward.1} parent=1 // pred_fallthru
      _
    // Predicated region
    $region18: #{mlp_forward.1} parent=1 // pred_check
      _
    $region19: #{mlp_forward.1} parent=1 // pred_check_branch
      %30 = sbr.rel (0) target = $region21
    $region20: #{mlp_forward.1} parent=1 // pred_region
      _
    $region21: #{mlp_forward.1} parent=1 // pred_fallthru
      _
    // Predicated region
    $region22: #{mlp_forward.1} parent=1 // pred_check
      _
    $region23: #{mlp_forward.1} parent=1 // pred_check_branch
      %32 = sbr.rel (0) target = $region25
    $region24: #{mlp_forward.1} parent=1 // pred_region
      %33 = dma.done [#allocation4], 32768
    $region25: #{mlp_forward.1} parent=1 // pred_fallthru
      _
    %p34 = scmp.eq.s32.totalorder 0, 0
    // Predicated region
    $region26: #{mlp_forward.1} parent=1 // pred_check
      %p35 = pneg %p34
    $region27: #{mlp_forward.1} parent=1 // pred_check_branch
      %37 = sbr.rel (%p35) target = $region29
    $region28: #{mlp_forward.1} parent=1 // pred_region
      %38 = vst [vmem:[#allocation2] sm:$0xff] 0.0
    $region29: #{mlp_forward.1} parent=1 // pred_fallthru
      _
    %v39 = vld [vmem:[%s0] sm:$0xff]
    %v40 = vld [vmem:[%s0 + $0x8] sm:$0xff]
    %v41 = vld [vmem:[%s0 + $0x10] sm:$0xff]
    %v42 = vld [vmem:[%s0 + $0x18] sm:$0xff]
    %v43 = vld [vmem:[%s0 + $0x20] sm:$0xff]
    %v44 = vld [vmem:[%s0 + $0x28] sm:$0xff]
    %v45 = vld [vmem:[%s0 + $0x30] sm:$0xff]
    %v46 = vld [vmem:[%s0 + $0x38] sm:$0xff]
    %v47 = vld [vmem:[#allocation3] sm:$0xff]
    %v48 = vld [vmem:[#allocation3 + $0x8] sm:$0xff]
    %v49 = vld [vmem:[#allocation3 + $0x10] sm:$0xff]
    %v50 = vld [vmem:[#allocation3 + $0x18] sm:$0xff]
    %v51 = vld [vmem:[#allocation3 + $0x20] sm:$0xff]
    %v52 = vld [vmem:[#allocation3 + $0x28] sm:$0xff]
    %v53 = vld [vmem:[#allocation3 + $0x30] sm:$0xff]
    %v54 = vld [vmem:[#allocation3 + $0x38] sm:$0xff]
    %v55 = vld [vmem:[#allocation3 + $0x40] sm:$0xff]
    %v56 = vld [vmem:[#allocation3 + $0x48] sm:$0xff]
    %v57 = vld [vmem:[#allocation3 + $0x50] sm:$0xff]
    %v58 = vld [vmem:[#allocation3 + $0x58] sm:$0xff]
    %v59 = vld [vmem:[#allocation3 + $0x60] sm:$0xff]
    %v60 = vld [vmem:[#allocation3 + $0x68] sm:$0xff]
    %v61 = vld [vmem:[#allocation3 + $0x70] sm:$0xff]
    %v62 = vld [vmem:[#allocation3 + $0x78] sm:$0xff]
    %v63 = vld [vmem:[#allocation3 + $0x80] sm:$0xff]
    %v64 = vld [vmem:[#allocation3 + $0x88] sm:$0xff]
    %v65 = vld [vmem:[#allocation3 + $0x90] sm:$0xff]
    %v66 = vld [vmem:[#allocation3 + $0x98] sm:$0xff]
    %v67 = vld [vmem:[#allocation3 + $0xa0] sm:$0xff]
    %v68 = vld [vmem:[#allocation3 + $0xa8] sm:$0xff]
    %v69 = vld [vmem:[#allocation3 + $0xb0] sm:$0xff]
    %v70 = vld [vmem:[#allocation3 + $0xb8] sm:$0xff]
    %v71 = vld [vmem:[#allocation3 + $0xc0] sm:$0xff]
    %v72 = vld [vmem:[#allocation3 + $0xc8] sm:$0xff]
    %v73 = vld [vmem:[#allocation3 + $0xd0] sm:$0xff]
    %v74 = vld [vmem:[#allocation3 + $0xd8] sm:$0xff]
    %v75 = vld [vmem:[#allocation3 + $0xe0] sm:$0xff]
    %v76 = vld [vmem:[#allocation3 + $0xe8] sm:$0xff]
    %v77 = vld [vmem:[#allocation3 + $0xf0] sm:$0xff]
    %v78 = vld [vmem:[#allocation3 + $0xf8] sm:$0xff]
    %v79 = vld [vmem:[#allocation3 + $0x100] sm:$0xff]
    %v80 = vld [vmem:[#allocation3 + $0x108] sm:$0xff]
    %v81 = vld [vmem:[#allocation3 + $0x110] sm:$0xff]
    %v82 = vld [vmem:[#allocation3 + $0x118] sm:$0xff]
    %v83 = vld [vmem:[#allocation3 + $0x120] sm:$0xff]
    %v84 = vld [vmem:[#allocation3 + $0x128] sm:$0xff]
    %v85 = vld [vmem:[#allocation3 + $0x130] sm:$0xff]
    %v86 = vld [vmem:[#allocation3 + $0x138] sm:$0xff]
    %v87 = vld [vmem:[#allocation3 + $0x140] sm:$0xff]
    %v88 = vld [vmem:[#allocation3 + $0x148] sm:$0xff]
    %v89 = vld [vmem:[#allocation3 + $0x150] sm:$0xff]
    %v90 = vld [vmem:[#allocation3 + $0x158] sm:$0xff]
    %v91 = vld [vmem:[#allocation3 + $0x160] sm:$0xff]
    %v92 = vld [vmem:[#allocation3 + $0x168] sm:$0xff]
    %v93 = vld [vmem:[#allocation3 + $0x170] sm:$0xff]
    %v94 = vld [vmem:[#allocation3 + $0x178] sm:$0xff]
    %v95 = vld [vmem:[#allocation3 + $0x180] sm:$0xff]
    %v96 = vld [vmem:[#allocation3 + $0x188] sm:$0xff]
    %v97 = vld [vmem:[#allocation3 + $0x190] sm:$0xff]
    %v98 = vld [vmem:[#allocation3 + $0x198] sm:$0xff]
    %v99 = vld [vmem:[#allocation3 + $0x1a0] sm:$0xff]
    %v100 = vld [vmem:[#allocation3 + $0x1a8] sm:$0xff]
    %v101 = vld [vmem:[#allocation3 + $0x1b0] sm:$0xff]
    %v102 = vld [vmem:[#allocation3 + $0x1b8] sm:$0xff]
    %v103 = vld [vmem:[#allocation3 + $0x1c0] sm:$0xff]
    %v104 = vld [vmem:[#allocation3 + $0x1c8] sm:$0xff]
    %v105 = vld [vmem:[#allocation3 + $0x1d0] sm:$0xff]
    %v106 = vld [vmem:[#allocation3 + $0x1d8] sm:$0xff]
    %v107 = vld [vmem:[#allocation3 + $0x1e0] sm:$0xff]
    %v108 = vld [vmem:[#allocation3 + $0x1e8] sm:$0xff]
    %v109 = vld [vmem:[#allocation3 + $0x1f0] sm:$0xff]
    %v110 = vld [vmem:[#allocation3 + $0x1f8] sm:$0xff]
    %v111 = vld [vmem:[#allocation3 + $0x200] sm:$0xff]
    %v112 = vld [vmem:[#allocation3 + $0x208] sm:$0xff]
    %v113 = vld [vmem:[#allocation3 + $0x210] sm:$0xff]
    %v114 = vld [vmem:[#allocation3 + $0x218] sm:$0xff]
    %v115 = vld [vmem:[#allocation3 + $0x220] sm:$0xff]
    %v116 = vld [vmem:[#allocation3 + $0x228] sm:$0xff]
    %v117 = vld [vmem:[#allocation3 + $0x230] sm:$0xff]
    %v118 = vld [vmem:[#allocation3 + $0x238] sm:$0xff]
    %v119 = vld [vmem:[#allocation3 + $0x240] sm:$0xff]
    %v120 = vld [vmem:[#allocation3 + $0x248] sm:$0xff]
    %v121 = vld [vmem:[#allocation3 + $0x250] sm:$0xff]
    %v122 = vld [vmem:[#allocation3 + $0x258] sm:$0xff]
    %v123 = vld [vmem:[#allocation3 + $0x260] sm:$0xff]
    %v124 = vld [vmem:[#allocation3 + $0x268] sm:$0xff]
    %v125 = vld [vmem:[#allocation3 + $0x270] sm:$0xff]
    %v126 = vld [vmem:[#allocation3 + $0x278] sm:$0xff]
    %v127 = vld [vmem:[#allocation3 + $0x280] sm:$0xff]
    %v128 = vld [vmem:[#allocation3 + $0x288] sm:$0xff]
    %v129 = vld [vmem:[#allocation3 + $0x290] sm:$0xff]
    %v130 = vld [vmem:[#allocation3 + $0x298] sm:$0xff]
    %v131 = vld [vmem:[#allocation3 + $0x2a0] sm:$0xff]
    %v132 = vld [vmem:[#allocation3 + $0x2a8] sm:$0xff]
    %v133 = vld [vmem:[#allocation3 + $0x2b0] sm:$0xff]
    %v134 = vld [vmem:[#allocation3 + $0x2b8] sm:$0xff]
    %v135 = vld [vmem:[#allocation3 + $0x2c0] sm:$0xff]
    %v136 = vld [vmem:[#allocation3 + $0x2c8] sm:$0xff]
    %v137 = vld [vmem:[#allocation3 + $0x2d0] sm:$0xff]
    %v138 = vld [vmem:[#allocation3 + $0x2d8] sm:$0xff]
    %v139 = vld [vmem:[#allocation3 + $0x2e0] sm:$0xff]
    %v140 = vld [vmem:[#allocation3 + $0x2e8] sm:$0xff]
    %v141 = vld [vmem:[#allocation3 + $0x2f0] sm:$0xff]
    %v142 = vld [vmem:[#allocation3 + $0x2f8] sm:$0xff]
    %v143 = vld [vmem:[#allocation3 + $0x300] sm:$0xff]
    %v144 = vld [vmem:[#allocation3 + $0x308] sm:$0xff]
    %v145 = vld [vmem:[#allocation3 + $0x310] sm:$0xff]
    %v146 = vld [vmem:[#allocation3 + $0x318] sm:$0xff]
    %v147 = vld [vmem:[#allocation3 + $0x320] sm:$0xff]
    %v148 = vld [vmem:[#allocation3 + $0x328] sm:$0xff]
    %v149 = vld [vmem:[#allocation3 + $0x330] sm:$0xff]
    %v150 = vld [vmem:[#allocation3 + $0x338] sm:$0xff]
    %v151 = vld [vmem:[#allocation3 + $0x340] sm:$0xff]
    %v152 = vld [vmem:[#allocation3 + $0x348] sm:$0xff]
    %v153 = vld [vmem:[#allocation3 + $0x350] sm:$0xff]
    %v154 = vld [vmem:[#allocation3 + $0x358] sm:$0xff]
    %v155 = vld [vmem:[#allocation3 + $0x360] sm:$0xff]
    %v156 = vld [vmem:[#allocation3 + $0x368] sm:$0xff]
    %v157 = vld [vmem:[#allocation3 + $0x370] sm:$0xff]
    %v158 = vld [vmem:[#allocation3 + $0x378] sm:$0xff]
    %v159 = vld [vmem:[#allocation3 + $0x380] sm:$0xff]
    %v160 = vld [vmem:[#allocation3 + $0x388] sm:$0xff]
    %v161 = vld [vmem:[#allocation3 + $0x390] sm:$0xff]
    %v162 = vld [vmem:[#allocation3 + $0x398] sm:$0xff]
    %v163 = vld [vmem:[#allocation3 + $0x3a0] sm:$0xff]
    %v164 = vld [vmem:[#allocation3 + $0x3a8] sm:$0xff]
    %v165 = vld [vmem:[#allocation3 + $0x3b0] sm:$0xff]
    %v166 = vld [vmem:[#allocation3 + $0x3b8] sm:$0xff]
    %v167 = vld [vmem:[#allocation3 + $0x3c0] sm:$0xff]
    %v168 = vld [vmem:[#allocation3 + $0x3c8] sm:$0xff]
    %v169 = vld [vmem:[#allocation3 + $0x3d0] sm:$0xff]
    %v170 = vld [vmem:[#allocation3 + $0x3d8] sm:$0xff]
    %v171 = vld [vmem:[#allocation3 + $0x3e0] sm:$0xff]
    %v172 = vld [vmem:[#allocation3 + $0x3e8] sm:$0xff]
    %v173 = vld [vmem:[#allocation3 + $0x3f0] sm:$0xff]
    %v174 = vld [vmem:[#allocation3 + $0x3f8] sm:$0xff]
    %v175 = vld [vmem:[#allocation3 + $0x400] sm:$0xff]
    %v176 = vld [vmem:[#allocation3 + $0x408] sm:$0xff]
    %v177 = vld [vmem:[#allocation3 + $0x410] sm:$0xff]
    %v178 = vld [vmem:[#allocation3 + $0x418] sm:$0xff]
    %v179 = vld [vmem:[#allocation3 + $0x420] sm:$0xff]
    %v180 = vld [vmem:[#allocation3 + $0x428] sm:$0xff]
    %v181 = vld [vmem:[#allocation3 + $0x430] sm:$0xff]
    %v182 = vld [vmem:[#allocation3 + $0x438] sm:$0xff]
    %v183 = vld [vmem:[#allocation3 + $0x440] sm:$0xff]
    %v184 = vld [vmem:[#allocation3 + $0x448] sm:$0xff]
    %v185 = vld [vmem:[#allocation3 + $0x450] sm:$0xff]
    %v186 = vld [vmem:[#allocation3 + $0x458] sm:$0xff]
    %v187 = vld [vmem:[#allocation3 + $0x460] sm:$0xff]
    %v188 = vld [vmem:[#allocation3 + $0x468] sm:$0xff]
    %v189 = vld [vmem:[#allocation3 + $0x470] sm:$0xff]
    %v190 = vld [vmem:[#allocation3 + $0x478] sm:$0xff]
    %v191 = vld [vmem:[#allocation3 + $0x480] sm:$0xff]
    %v192 = vld [vmem:[#allocation3 + $0x488] sm:$0xff]
    %v193 = vld [vmem:[#allocation3 + $0x490] sm:$0xff]
    %v194 = vld [vmem:[#allocation3 + $0x498] sm:$0xff]
    %v195 = vld [vmem:[#allocation3 + $0x4a0] sm:$0xff]
    %v196 = vld [vmem:[#allocation3 + $0x4a8] sm:$0xff]
    %v197 = vld [vmem:[#allocation3 + $0x4b0] sm:$0xff]
    %v198 = vld [vmem:[#allocation3 + $0x4b8] sm:$0xff]
    %v199 = vld [vmem:[#allocation3 + $0x4c0] sm:$0xff]
    %v200 = vld [vmem:[#allocation3 + $0x4c8] sm:$0xff]
    %v201 = vld [vmem:[#allocation3 + $0x4d0] sm:$0xff]
    %v202 = vld [vmem:[#allocation3 + $0x4d8] sm:$0xff]
    %v203 = vld [vmem:[#allocation3 + $0x4e0] sm:$0xff]
    %v204 = vld [vmem:[#allocation3 + $0x4e8] sm:$0xff]
    %v205 = vld [vmem:[#allocation3 + $0x4f0] sm:$0xff]
    %v206 = vld [vmem:[#allocation3 + $0x4f8] sm:$0xff]
    %v207 = vld [vmem:[#allocation3 + $0x500] sm:$0xff]
    %v208 = vld [vmem:[#allocation3 + $0x508] sm:$0xff]
    %v209 = vld [vmem:[#allocation3 + $0x510] sm:$0xff]
    %v210 = vld [vmem:[#allocation3 + $0x518] sm:$0xff]
    %v211 = vld [vmem:[#allocation3 + $0x520] sm:$0xff]
    %v212 = vld [vmem:[#allocation3 + $0x528] sm:$0xff]
    %v213 = vld [vmem:[#allocation3 + $0x530] sm:$0xff]
    %v214 = vld [vmem:[#allocation3 + $0x538] sm:$0xff]
    %v215 = vld [vmem:[#allocation3 + $0x540] sm:$0xff]
    %v216 = vld [vmem:[#allocation3 + $0x548] sm:$0xff]
    %v217 = vld [vmem:[#allocation3 + $0x550] sm:$0xff]
    %v218 = vld [vmem:[#allocation3 + $0x558] sm:$0xff]
    %v219 = vld [vmem:[#allocation3 + $0x560] sm:$0xff]
    %v220 = vld [vmem:[#allocation3 + $0x568] sm:$0xff]
    %v221 = vld [vmem:[#allocation3 + $0x570] sm:$0xff]
    %v222 = vld [vmem:[#allocation3 + $0x578] sm:$0xff]
    %v223 = vld [vmem:[#allocation3 + $0x580] sm:$0xff]
    %v224 = vld [vmem:[#allocation3 + $0x588] sm:$0xff]
    %v225 = vld [vmem:[#allocation3 + $0x590] sm:$0xff]
    %v226 = vld [vmem:[#allocation3 + $0x598] sm:$0xff]
    %v227 = vld [vmem:[#allocation3 + $0x5a0] sm:$0xff]
    %v228 = vld [vmem:[#allocation3 + $0x5a8] sm:$0xff]
    %v229 = vld [vmem:[#allocation3 + $0x5b0] sm:$0xff]
    %v230 = vld [vmem:[#allocation3 + $0x5b8] sm:$0xff]
    %v231 = vld [vmem:[#allocation3 + $0x5c0] sm:$0xff]
    %v232 = vld [vmem:[#allocation3 + $0x5c8] sm:$0xff]
    %v233 = vld [vmem:[#allocation3 + $0x5d0] sm:$0xff]
    %v234 = vld [vmem:[#allocation3 + $0x5d8] sm:$0xff]
    %v235 = vld [vmem:[#allocation3 + $0x5e0] sm:$0xff]
    %v236 = vld [vmem:[#allocation3 + $0x5e8] sm:$0xff]
    %v237 = vld [vmem:[#allocation3 + $0x5f0] sm:$0xff]
    %v238 = vld [vmem:[#allocation3 + $0x5f8] sm:$0xff]
    %v239 = vld [vmem:[#allocation3 + $0x600] sm:$0xff]
    %v240 = vld [vmem:[#allocation3 + $0x608] sm:$0xff]
    %v241 = vld [vmem:[#allocation3 + $0x610] sm:$0xff]
    %v242 = vld [vmem:[#allocation3 + $0x618] sm:$0xff]
    %v243 = vld [vmem:[#allocation3 + $0x620] sm:$0xff]
    %v244 = vld [vmem:[#allocation3 + $0x628] sm:$0xff]
    %v245 = vld [vmem:[#allocation3 + $0x630] sm:$0xff]
    %v246 = vld [vmem:[#allocation3 + $0x638] sm:$0xff]
    %v247 = vld [vmem:[#allocation3 + $0x640] sm:$0xff]
    %v248 = vld [vmem:[#allocation3 + $0x648] sm:$0xff]
    %v249 = vld [vmem:[#allocation3 + $0x650] sm:$0xff]
    %v250 = vld [vmem:[#allocation3 + $0x658] sm:$0xff]
    %v251 = vld [vmem:[#allocation3 + $0x660] sm:$0xff]
    %v252 = vld [vmem:[#allocation3 + $0x668] sm:$0xff]
    %v253 = vld [vmem:[#allocation3 + $0x670] sm:$0xff]
    %v254 = vld [vmem:[#allocation3 + $0x678] sm:$0xff]
    %v255 = vld [vmem:[#allocation3 + $0x680] sm:$0xff]
    %v256 = vld [vmem:[#allocation3 + $0x688] sm:$0xff]
    %v257 = vld [vmem:[#allocation3 + $0x690] sm:$0xff]
    %v258 = vld [vmem:[#allocation3 + $0x698] sm:$0xff]
    %v259 = vld [vmem:[#allocation3 + $0x6a0] sm:$0xff]
    %v260 = vld [vmem:[#allocation3 + $0x6a8] sm:$0xff]
    %v261 = vld [vmem:[#allocation3 + $0x6b0] sm:$0xff]
    %v262 = vld [vmem:[#allocation3 + $0x6b8] sm:$0xff]
    %v263 = vld [vmem:[#allocation3 + $0x6c0] sm:$0xff]
    %v264 = vld [vmem:[#allocation3 + $0x6c8] sm:$0xff]
    %v265 = vld [vmem:[#allocation3 + $0x6d0] sm:$0xff]
    %v266 = vld [vmem:[#allocation3 + $0x6d8] sm:$0xff]
    %v267 = vld [vmem:[#allocation3 + $0x6e0] sm:$0xff]
    %v268 = vld [vmem:[#allocation3 + $0x6e8] sm:$0xff]
    %v269 = vld [vmem:[#allocation3 + $0x6f0] sm:$0xff]
    %v270 = vld [vmem:[#allocation3 + $0x6f8] sm:$0xff]
    %v271 = vld [vmem:[#allocation3 + $0x700] sm:$0xff]
    %v272 = vld [vmem:[#allocation3 + $0x708] sm:$0xff]
    %v273 = vld [vmem:[#allocation3 + $0x710] sm:$0xff]
    %v274 = vld [vmem:[#allocation3 + $0x718] sm:$0xff]
    %v275 = vld [vmem:[#allocation3 + $0x720] sm:$0xff]
    %v276 = vld [vmem:[#allocation3 + $0x728] sm:$0xff]
    %v277 = vld [vmem:[#allocation3 + $0x730] sm:$0xff]
    %v278 = vld [vmem:[#allocation3 + $0x738] sm:$0xff]
    %v279 = vld [vmem:[#allocation3 + $0x740] sm:$0xff]
    %v280 = vld [vmem:[#allocation3 + $0x748] sm:$0xff]
    %v281 = vld [vmem:[#allocation3 + $0x750] sm:$0xff]
    %v282 = vld [vmem:[#allocation3 + $0x758] sm:$0xff]
    %v283 = vld [vmem:[#allocation3 + $0x760] sm:$0xff]
    %v284 = vld [vmem:[#allocation3 + $0x768] sm:$0xff]
    %v285 = vld [vmem:[#allocation3 + $0x770] sm:$0xff]
    %v286 = vld [vmem:[#allocation3 + $0x778] sm:$0xff]
    %v287 = vld [vmem:[#allocation3 + $0x780] sm:$0xff]
    %v288 = vld [vmem:[#allocation3 + $0x788] sm:$0xff]
    %v289 = vld [vmem:[#allocation3 + $0x790] sm:$0xff]
    %v290 = vld [vmem:[#allocation3 + $0x798] sm:$0xff]
    %v291 = vld [vmem:[#allocation3 + $0x7a0] sm:$0xff]
    %v292 = vld [vmem:[#allocation3 + $0x7a8] sm:$0xff]
    %v293 = vld [vmem:[#allocation3 + $0x7b0] sm:$0xff]
    %v294 = vld [vmem:[#allocation3 + $0x7b8] sm:$0xff]
    %v295 = vld [vmem:[#allocation3 + $0x7c0] sm:$0xff]
    %v296 = vld [vmem:[#allocation3 + $0x7c8] sm:$0xff]
    %v297 = vld [vmem:[#allocation3 + $0x7d0] sm:$0xff]
    %v298 = vld [vmem:[#allocation3 + $0x7d8] sm:$0xff]
    %v299 = vld [vmem:[#allocation3 + $0x7e0] sm:$0xff]
    %v300 = vld [vmem:[#allocation3 + $0x7e8] sm:$0xff]
    %v301 = vld [vmem:[#allocation3 + $0x7f0] sm:$0xff]
    %v302 = vld [vmem:[#allocation3 + $0x7f8] sm:$0xff]
    %v303 = vld [vmem:[%s2] sm:$0x3]
    %v305 = vlaneseq
    %v306 = vshrl.u32 %v305, 7
    %v307 = vsub.s32 0, %v306
    %v308 = vrot.slane %v303, %v307
    %v309 = vlaneseq
    %v310 = vshrl.u32 %v309, 7
    %v311 = vsub.s32 1, %v310
    %v312 = vrot.slane %v303, %v311
    %315 = vmatprep.subr.mxu0 %v78
    %316 = vmatpush1.msra.mxu0 %v77
    %317 = vmatprep.subr.mxu0 %v76
    %318 = vmatpush1.msra.mxu0 %v75
    %319 = vmatprep.subr.mxu0 %v74
    %320 = vmatpush1.msra.mxu0 %v73
    %321 = vmatprep.subr.mxu0 %v72
    %322 = vmatpush1.msra.mxu0 %v71
    %323 = vmatprep.subr.mxu0 %v70
    %324 = vmatpush1.msra.mxu0 %v69
    %325 = vmatprep.subr.mxu0 %v68
    %326 = vmatpush1.msra.mxu0 %v67
    %327 = vmatprep.subr.mxu0 %v66
    %328 = vmatpush1.msra.mxu0 %v65
    %329 = vmatprep.subr.mxu0 %v64
    %330 = vmatpush1.msra.mxu0 %v63
    %331 = vmatprep.subr.mxu0 %v62
    %332 = vmatpush1.msra.mxu0 %v61
    %333 = vmatprep.subr.mxu0 %v60
    %334 = vmatpush1.msra.mxu0 %v59
    %335 = vmatprep.subr.mxu0 %v58
    %336 = vmatpush1.msra.mxu0 %v57
    %337 = vmatprep.subr.mxu0 %v56
    %338 = vmatpush1.msra.mxu0 %v55
    %339 = vmatprep.subr.mxu0 %v54
    %340 = vmatpush1.msra.mxu0 %v53
    %341 = vmatprep.subr.mxu0 %v52
    %342 = vmatpush1.msra.mxu0 %v51
    %343 = vmatprep.subr.mxu0 %v50
    %344 = vmatpush1.msra.mxu0 %v49
    %345 = vmatprep.subr.mxu0 %v48
    %346 = vmatpush1.msra.mxu0 %v47
    %347 = vmatprep.subr.mxu0 %v110
    %348 = vmatpush2.msra.mxu0 %v109
    %349 = vmatprep.subr.mxu0 %v108
    %350 = vmatpush2.msra.mxu0 %v107
    %351 = vmatprep.subr.mxu0 %v106
    %352 = vmatpush2.msra.mxu0 %v105
    %353 = vmatprep.subr.mxu0 %v104
    %354 = vmatpush2.msra.mxu0 %v103
    %355 = vmatprep.subr.mxu0 %v102
    %356 = vmatpush2.msra.mxu0 %v101
    %357 = vmatprep.subr.mxu0 %v100
    %358 = vmatpush2.msra.mxu0 %v99
    %359 = vmatprep.subr.mxu0 %v98
    %360 = vmatpush2.msra.mxu0 %v97
    %361 = vmatprep.subr.mxu0 %v96
    %362 = vmatpush2.msra.mxu0 %v95
    %363 = vmatprep.subr.mxu0 %v94
    %364 = vmatpush2.msra.mxu0 %v93
    %365 = vmatprep.subr.mxu0 %v92
    %366 = vmatpush2.msra.mxu0 %v91
    %367 = vmatprep.subr.mxu0 %v90
    %368 = vmatpush2.msra.mxu0 %v89
    %369 = vmatprep.subr.mxu0 %v88
    %370 = vmatpush2.msra.mxu0 %v87
    %371 = vmatprep.subr.mxu0 %v86
    %372 = vmatpush2.msra.mxu0 %v85
    %373 = vmatprep.subr.mxu0 %v84
    %374 = vmatpush2.msra.mxu0 %v83
    %375 = vmatprep.subr.mxu0 %v82
    %376 = vmatpush2.msra.mxu0 %v81
    %377 = vmatprep.subr.mxu0 %v80
    %378 = vmatpush2.msra.mxu0 %v79
    %379 = vmatprep.mubr.f32.mxu0 %v40
    %380 = vmatmul.mubr.f32.gmra.mxu0 %v39
    %v381 = vpop.f32.mrf.mxu0
    %v382 = vadd.f32 %v308, %v381
    %v383 = vpop.f32.mrf.mxu0
    %v384 = vadd.f32 %v312, %v383
    %385 = vdwg.mxu0
    %386 = vmatprep.subr.mxu0 %v142
    %387 = vmatpush1.msra.mxu0 %v141
    %388 = vmatprep.subr.mxu0 %v140
    %389 = vmatpush1.msra.mxu0 %v139
    %390 = vmatprep.subr.mxu0 %v138
    %391 = vmatpush1.msra.mxu0 %v137
    %392 = vmatprep.subr.mxu0 %v136
    %393 = vmatpush1.msra.mxu0 %v135
    %394 = vmatprep.subr.mxu0 %v134
    %395 = vmatpush1.msra.mxu0 %v133
    %396 = vmatprep.subr.mxu0 %v132
    %397 = vmatpush1.msra.mxu0 %v131
    %398 = vmatprep.subr.mxu0 %v130
    %399 = vmatpush1.msra.mxu0 %v129
    %400 = vmatprep.subr.mxu0 %v128
    %401 = vmatpush1.msra.mxu0 %v127
    %402 = vmatprep.subr.mxu0 %v126
    %403 = vmatpush1.msra.mxu0 %v125
    %404 = vmatprep.subr.mxu0 %v124
    %405 = vmatpush1.msra.mxu0 %v123
    %406 = vmatprep.subr.mxu0 %v122
    %407 = vmatpush1.msra.mxu0 %v121
    %408 = vmatprep.subr.mxu0 %v120
    %409 = vmatpush1.msra.mxu0 %v119
    %410 = vmatprep.subr.mxu0 %v118
    %411 = vmatpush1.msra.mxu0 %v117
    %412 = vmatprep.subr.mxu0 %v116
    %413 = vmatpush1.msra.mxu0 %v115
    %414 = vmatprep.subr.mxu0 %v114
    %415 = vmatpush1.msra.mxu0 %v113
    %416 = vmatprep.subr.mxu0 %v112
    %417 = vmatpush1.msra.mxu0 %v111
    %418 = vmatprep.subr.mxu0 %v174
    %419 = vmatpush2.msra.mxu0 %v173
    %420 = vmatprep.subr.mxu0 %v172
    %421 = vmatpush2.msra.mxu0 %v171
    %422 = vmatprep.subr.mxu0 %v170
    %423 = vmatpush2.msra.mxu0 %v169
    %424 = vmatprep.subr.mxu0 %v168
    %425 = vmatpush2.msra.mxu0 %v167
    %426 = vmatprep.subr.mxu0 %v166
    %427 = vmatpush2.msra.mxu0 %v165
    %428 = vmatprep.subr.mxu0 %v164
    %429 = vmatpush2.msra.mxu0 %v163
    %430 = vmatprep.subr.mxu0 %v162
    %431 = vmatpush2.msra.mxu0 %v161
    %432 = vmatprep.subr.mxu0 %v160
    %433 = vmatpush2.msra.mxu0 %v159
    %434 = vmatprep.subr.mxu0 %v158
    %435 = vmatpush2.msra.mxu0 %v157
    %436 = vmatprep.subr.mxu0 %v156
    %437 = vmatpush2.msra.mxu0 %v155
    %438 = vmatprep.subr.mxu0 %v154
    %439 = vmatpush2.msra.mxu0 %v153
    %440 = vmatprep.subr.mxu0 %v152
    %441 = vmatpush2.msra.mxu0 %v151
    %442 = vmatprep.subr.mxu0 %v150
    %443 = vmatpush2.msra.mxu0 %v149
    %444 = vmatprep.subr.mxu0 %v148
    %445 = vmatpush2.msra.mxu0 %v147
    %446 = vmatprep.subr.mxu0 %v146
    %447 = vmatpush2.msra.mxu0 %v145
    %448 = vmatprep.subr.mxu0 %v144
    %449 = vmatpush2.msra.mxu0 %v143
    %450 = vmatprep.mubr.f32.mxu0 %v42
    %451 = vmatmul.mubr.f32.gmra.mxu0 %v41
    %v452 = vpop.f32.mrf.mxu0
    %v453 = vadd.f32 %v382, %v452
    %v454 = vpop.f32.mrf.mxu0
    %v455 = vadd.f32 %v384, %v454
    %456 = vdwg.mxu0
    %457 = vmatprep.subr.mxu0 %v206
    %458 = vmatpush1.msra.mxu0 %v205
    %459 = vmatprep.subr.mxu0 %v204
    %460 = vmatpush1.msra.mxu0 %v203
    %461 = vmatprep.subr.mxu0 %v202
    %462 = vmatpush1.msra.mxu0 %v201
    %463 = vmatprep.subr.mxu0 %v200
    %464 = vmatpush1.msra.mxu0 %v199
    %465 = vmatprep.subr.mxu0 %v198
    %466 = vmatpush1.msra.mxu0 %v197
    %467 = vmatprep.subr.mxu0 %v196
    %468 = vmatpush1.msra.mxu0 %v195
    %469 = vmatprep.subr.mxu0 %v194
    %470 = vmatpush1.msra.mxu0 %v193
    %471 = vmatprep.subr.mxu0 %v192
    %472 = vmatpush1.msra.mxu0 %v191
    %473 = vmatprep.subr.mxu0 %v190
    %474 = vmatpush1.msra.mxu0 %v189
    %475 = vmatprep.subr.mxu0 %v188
    %476 = vmatpush1.msra.mxu0 %v187
    %477 = vmatprep.subr.mxu0 %v186
    %478 = vmatpush1.msra.mxu0 %v185
    %479 = vmatprep.subr.mxu0 %v184
    %480 = vmatpush1.msra.mxu0 %v183
    %481 = vmatprep.subr.mxu0 %v182
    %482 = vmatpush1.msra.mxu0 %v181
    %483 = vmatprep.subr.mxu0 %v180
    %484 = vmatpush1.msra.mxu0 %v179
    %485 = vmatprep.subr.mxu0 %v178
    %486 = vmatpush1.msra.mxu0 %v177
    %487 = vmatprep.subr.mxu0 %v176
    %488 = vmatpush1.msra.mxu0 %v175
    %489 = vmatprep.subr.mxu0 %v238
    %490 = vmatpush2.msra.mxu0 %v237
    %491 = vmatprep.subr.mxu0 %v236
    %492 = vmatpush2.msra.mxu0 %v235
    %493 = vmatprep.subr.mxu0 %v234
    %494 = vmatpush2.msra.mxu0 %v233
    %495 = vmatprep.subr.mxu0 %v232
    %496 = vmatpush2.msra.mxu0 %v231
    %497 = vmatprep.subr.mxu0 %v230
    %498 = vmatpush2.msra.mxu0 %v229
    %499 = vmatprep.subr.mxu0 %v228
    %500 = vmatpush2.msra.mxu0 %v227
    %501 = vmatprep.subr.mxu0 %v226
    %502 = vmatpush2.msra.mxu0 %v225
    %503 = vmatprep.subr.mxu0 %v224
    %504 = vmatpush2.msra.mxu0 %v223
    %505 = vmatprep.subr.mxu0 %v222
    %506 = vmatpush2.msra.mxu0 %v221
    %507 = vmatprep.subr.mxu0 %v220
    %508 = vmatpush2.msra.mxu0 %v219
    %509 = vmatprep.subr.mxu0 %v218
    %510 = vmatpush2.msra.mxu0 %v217
    %511 = vmatprep.subr.mxu0 %v216
    %512 = vmatpush2.msra.mxu0 %v215
    %513 = vmatprep.subr.mxu0 %v214
    %514 = vmatpush2.msra.mxu0 %v213
    %515 = vmatprep.subr.mxu0 %v212
    %516 = vmatpush2.msra.mxu0 %v211
    %517 = vmatprep.subr.mxu0 %v210
    %518 = vmatpush2.msra.mxu0 %v209
    %519 = vmatprep.subr.mxu0 %v208
    %520 = vmatpush2.msra.mxu0 %v207
    %521 = vmatprep.mubr.f32.mxu0 %v44
    %522 = vmatmul.mubr.f32.gmra.mxu0 %v43
    %v523 = vpop.f32.mrf.mxu0
    %v524 = vadd.f32 %v453, %v523
    %v525 = vpop.f32.mrf.mxu0
    %v526 = vadd.f32 %v455, %v525
    %527 = vdwg.mxu0
    %528 = vmatprep.subr.mxu0 %v270
    %529 = vmatpush1.msra.mxu0 %v269
    %530 = vmatprep.subr.mxu0 %v268
    %531 = vmatpush1.msra.mxu0 %v267
    %532 = vmatprep.subr.mxu0 %v266
    %533 = vmatpush1.msra.mxu0 %v265
    %534 = vmatprep.subr.mxu0 %v264
    %535 = vmatpush1.msra.mxu0 %v263
    %536 = vmatprep.subr.mxu0 %v262
    %537 = vmatpush1.msra.mxu0 %v261
    %538 = vmatprep.subr.mxu0 %v260
    %539 = vmatpush1.msra.mxu0 %v259
    %540 = vmatprep.subr.mxu0 %v258
    %541 = vmatpush1.msra.mxu0 %v257
    %542 = vmatprep.subr.mxu0 %v256
    %543 = vmatpush1.msra.mxu0 %v255
    %544 = vmatprep.subr.mxu0 %v254
    %545 = vmatpush1.msra.mxu0 %v253
    %546 = vmatprep.subr.mxu0 %v252
    %547 = vmatpush1.msra.mxu0 %v251
    %548 = vmatprep.subr.mxu0 %v250
    %549 = vmatpush1.msra.mxu0 %v249
    %550 = vmatprep.subr.mxu0 %v248
    %551 = vmatpush1.msra.mxu0 %v247
    %552 = vmatprep.subr.mxu0 %v246
    %553 = vmatpush1.msra.mxu0 %v245
    %554 = vmatprep.subr.mxu0 %v244
    %555 = vmatpush1.msra.mxu0 %v243
    %556 = vmatprep.subr.mxu0 %v242
    %557 = vmatpush1.msra.mxu0 %v241
    %558 = vmatprep.subr.mxu0 %v240
    %559 = vmatpush1.msra.mxu0 %v239
    %560 = vmatprep.subr.mxu0 %v302
    %561 = vmatpush2.msra.mxu0 %v301
    %562 = vmatprep.subr.mxu0 %v300
    %563 = vmatpush2.msra.mxu0 %v299
    %564 = vmatprep.subr.mxu0 %v298
    %565 = vmatpush2.msra.mxu0 %v297
    %566 = vmatprep.subr.mxu0 %v296
    %567 = vmatpush2.msra.mxu0 %v295
    %568 = vmatprep.subr.mxu0 %v294
    %569 = vmatpush2.msra.mxu0 %v293
    %570 = vmatprep.subr.mxu0 %v292
    %571 = vmatpush2.msra.mxu0 %v291
    %572 = vmatprep.subr.mxu0 %v290
    %573 = vmatpush2.msra.mxu0 %v289
    %574 = vmatprep.subr.mxu0 %v288
    %575 = vmatpush2.msra.mxu0 %v287
    %576 = vmatprep.subr.mxu0 %v286
    %577 = vmatpush2.msra.mxu0 %v285
    %578 = vmatprep.subr.mxu0 %v284
    %579 = vmatpush2.msra.mxu0 %v283
    %580 = vmatprep.subr.mxu0 %v282
    %581 = vmatpush2.msra.mxu0 %v281
    %582 = vmatprep.subr.mxu0 %v280
    %583 = vmatpush2.msra.mxu0 %v279
    %584 = vmatprep.subr.mxu0 %v278
    %585 = vmatpush2.msra.mxu0 %v277
    %586 = vmatprep.subr.mxu0 %v276
    %587 = vmatpush2.msra.mxu0 %v275
    %588 = vmatprep.subr.mxu0 %v274
    %589 = vmatpush2.msra.mxu0 %v273
    %590 = vmatprep.subr.mxu0 %v272
    %591 = vmatpush2.msra.mxu0 %v271
    %592 = vmatprep.mubr.f32.mxu0 %v46
    %593 = vmatmul.mubr.f32.gmra.mxu0 %v45
    %v594 = vpop.f32.mrf.mxu0
    %v595 = vadd.f32 %v524, %v594
    %v596 = vpop.f32.mrf.mxu0
    %v597 = vadd.f32 %v526, %v596
    %598 = vdwg.mxu0
    %v599 = vmax.f32 %v595, 0.0
    %v600 = vmax.f32 %v597, 0.0
    %v601 = vld [vmem:[#allocation2] sm:$0xff]
    %v602 = vld [vmem:[%s3] sm:$0xff]
    %v603 = vld [vmem:[%s3 + $0x8] sm:$0xff]
    %v604 = vld [vmem:[%s3 + $0x10] sm:$0xff]
    %v605 = vld [vmem:[%s3 + $0x18] sm:$0xff]
    %v606 = vld [vmem:[%s3 + $0x20] sm:$0xff]
    %v607 = vld [vmem:[%s3 + $0x28] sm:$0xff]
    %v608 = vld [vmem:[%s3 + $0x30] sm:$0xff]
    %v609 = vld [vmem:[%s3 + $0x38] sm:$0xff]
    %v610 = vld [vmem:[%s3 + $0x40] sm:$0xff]
    %v611 = vld [vmem:[%s3 + $0x48] sm:$0xff]
    %v612 = vld [vmem:[%s3 + $0x50] sm:$0xff]
    %v613 = vld [vmem:[%s3 + $0x58] sm:$0xff]
    %v614 = vld [vmem:[%s3 + $0x60] sm:$0xff]
    %v615 = vld [vmem:[%s3 + $0x68] sm:$0xff]
    %v616 = vld [vmem:[%s3 + $0x70] sm:$0xff]
    %v617 = vld [vmem:[%s3 + $0x78] sm:$0xff]
    %v618 = vld [vmem:[%s3 + $0x80] sm:$0xff]
    %v619 = vld [vmem:[%s3 + $0x88] sm:$0xff]
    %v620 = vld [vmem:[%s3 + $0x90] sm:$0xff]
    %v621 = vld [vmem:[%s3 + $0x98] sm:$0xff]
    %v622 = vld [vmem:[%s3 + $0xa0] sm:$0xff]
    %v623 = vld [vmem:[%s3 + $0xa8] sm:$0xff]
    %v624 = vld [vmem:[%s3 + $0xb0] sm:$0xff]
    %v625 = vld [vmem:[%s3 + $0xb8] sm:$0xff]
    %v626 = vld [vmem:[%s3 + $0xc0] sm:$0xff]
    %v627 = vld [vmem:[%s3 + $0xc8] sm:$0xff]
    %v628 = vld [vmem:[%s3 + $0xd0] sm:$0xff]
    %v629 = vld [vmem:[%s3 + $0xd8] sm:$0xff]
    %v630 = vld [vmem:[%s3 + $0xe0] sm:$0xff]
    %v631 = vld [vmem:[%s3 + $0xe8] sm:$0xff]
    %v632 = vld [vmem:[%s3 + $0xf0] sm:$0xff]
    %v633 = vld [vmem:[%s3 + $0xf8] sm:$0xff]
    %634 = vmatprep.subr.mxu0 0.0
    %635 = vmatpush1.msra.mxu0 %v617
    %636 = vmatprep.subr.mxu0 0.0
    %637 = vmatpush1.msra.mxu0 %v616
    %638 = vmatprep.subr.mxu0 0.0
    %639 = vmatpush1.msra.mxu0 %v615
    %640 = vmatprep.subr.mxu0 0.0
    %641 = vmatpush1.msra.mxu0 %v614
    %642 = vmatprep.subr.mxu0 0.0
    %643 = vmatpush1.msra.mxu0 %v613
    %644 = vmatprep.subr.mxu0 0.0
    %645 = vmatpush1.msra.mxu0 %v612
    %646 = vmatprep.subr.mxu0 0.0
    %647 = vmatpush1.msra.mxu0 %v611
    %648 = vmatprep.subr.mxu0 0.0
    %649 = vmatpush1.msra.mxu0 %v610
    %650 = vmatprep.subr.mxu0 0.0
    %651 = vmatpush1.msra.mxu0 %v609
    %652 = vmatprep.subr.mxu0 0.0
    %653 = vmatpush1.msra.mxu0 %v608
    %654 = vmatprep.subr.mxu0 0.0
    %655 = vmatpush1.msra.mxu0 %v607
    %656 = vmatprep.subr.mxu0 0.0
    %657 = vmatpush1.msra.mxu0 %v606
    %658 = vmatprep.subr.mxu0 0.0
    %659 = vmatpush1.msra.mxu0 %v605
    %660 = vmatprep.subr.mxu0 0.0
    %661 = vmatpush1.msra.mxu0 %v604
    %662 = vmatprep.subr.mxu0 0.0
    %663 = vmatpush1.msra.mxu0 %v603
    %664 = vmatprep.subr.mxu0 0.0
    %665 = vmatpush1.msra.mxu0 %v602
    %666 = vmatprep.subr.mxu0 0.0
    %667 = vmatpush2.msra.mxu0 %v633
    %668 = vmatprep.subr.mxu0 0.0
    %669 = vmatpush2.msra.mxu0 %v632
    %670 = vmatprep.subr.mxu0 0.0
    %671 = vmatpush2.msra.mxu0 %v631
    %672 = vmatprep.subr.mxu0 0.0
    %673 = vmatpush2.msra.mxu0 %v630
    %674 = vmatprep.subr.mxu0 0.0
    %675 = vmatpush2.msra.mxu0 %v629
    %676 = vmatprep.subr.mxu0 0.0
    %677 = vmatpush2.msra.mxu0 %v628
    %678 = vmatprep.subr.mxu0 0.0
    %679 = vmatpush2.msra.mxu0 %v627
    %680 = vmatprep.subr.mxu0 0.0
    %681 = vmatpush2.msra.mxu0 %v626
    %682 = vmatprep.subr.mxu0 0.0
    %683 = vmatpush2.msra.mxu0 %v625
    %684 = vmatprep.subr.mxu0 0.0
    %685 = vmatpush2.msra.mxu0 %v624
    %686 = vmatprep.subr.mxu0 0.0
    %687 = vmatpush2.msra.mxu0 %v623
    %688 = vmatprep.subr.mxu0 0.0
    %689 = vmatpush2.msra.mxu0 %v622
    %690 = vmatprep.subr.mxu0 0.0
    %691 = vmatpush2.msra.mxu0 %v621
    %692 = vmatprep.subr.mxu0 0.0
    %693 = vmatpush2.msra.mxu0 %v620
    %694 = vmatprep.subr.mxu0 0.0
    %695 = vmatpush2.msra.mxu0 %v619
    %696 = vmatprep.subr.mxu0 0.0
    %697 = vmatpush2.msra.mxu0 %v618
    %698 = vmatprep.mubr.f32.mxu0 %v600
    %699 = vmatmul.mubr.f32.gmra.mxu0 %v599
    %v700 = vpop.f32.mrf.mxu0
    %v701 = vadd.f32 0.0, %v700
    %v702 = vpop.f32.mrf.mxu0
    %703 = vdwg.mxu0
    %v704 = vadd.f32 %v601, %v701
    %705 = vst [vmem:[#allocation2] sm:$0xff] %v704
    // Predicated region
    $region30: #{mlp_forward.1} parent=1 // pred_check
      %p706 = pneg %p34
    $region31: #{mlp_forward.1} parent=1 // pred_check_branch
      %708 = sbr.rel (%p706) target = $region33
    $region32: #{mlp_forward.1} parent=1 // pred_region
      %v709 = vld [vmem:[#allocation2] sm:$0xff]
      %v710 = vld [vmem:[%s4] sm:$0x1]
      %v712 = vlaneseq
      %v713 = vshrl.u32 %v712, 7
      %v714 = vsub.s32 0, %v713
      %v715 = vrot.slane %v710, %v714
      %v717 = vadd.f32 %v709, %v715
      %718 = vst [vmem:[%s5] sm:$0xff] %v717
    $region33: #{mlp_forward.1} parent=1 // pred_fallthru
      _
    // Predicated region
    $region34: #{mlp_forward.1} parent=1 // pred_check
      _
    $region35: #{mlp_forward.1} parent=1 // pred_check_branch
      %720 = sbr.rel (0) target = $region37
    $region36: #{mlp_forward.1} parent=1 // pred_region
      _
    $region37: #{mlp_forward.1} parent=1 // pred_fallthru
      _
    // Predicated region
    $region38: #{mlp_forward.1} parent=1 // pred_check
      _
    $region39: #{mlp_forward.1} parent=1 // pred_check_branch
      %722 = sbr.rel (0) target = $region41
    $region40: #{mlp_forward.1} parent=1 // pred_region
      _
    $region41: #{mlp_forward.1} parent=1 // pred_fallthru
      _
    %723 = vsyncpa [#allocation4], 1

</llo_original>
